<compile_context>
chip_gen: v7x
topology: tpu7x:2x2x1
jax: 0.10.0
libtpu: 0.0.40
codegen_flags: <defaults>
</compile_context>

<pallas_src>
import jax
import jax.numpy as jnp
from jax import lax
from jax.experimental import pallas as pl
from jax.experimental.pallas import tpu as pltpu


def _make_kernel(*, beta, aggregate, weighted, n_valid, tn, c):
    # Plain Python floats -> folded into the kernel as literals (no captured
    # device-array constants, which pallas_call rejects).
    one_plus_beta = 1.0 + float(beta)
    inv_n = 1.0 / float(n_valid)

    def kernel(*refs):
        x_ref = refs[0]
        tgt_ref = refs[1]
        if weighted:
            w_ref = refs[2]
            out_ref = refs[3]
        else:
            w_ref = None
            out_ref = refs[2]

        i = pl.program_id(0)

        x = x_ref[...]                                       # (tn, c) input dtype
        m = jnp.max(x, axis=1, keepdims=True)                # (tn, 1)
        # Only f32 intermediate actually needed (exp / lse); no standalone
        # whole-tile astype copy of the input.
        shifted = (x - m).astype(jnp.float32)                # (tn, c) f32
        lse = jnp.log(jnp.sum(jnp.exp(shifted), axis=1, keepdims=True))  # (tn, 1)

        # gather shifted at the target class via one-hot select
        col = lax.broadcasted_iota(jnp.int32, (tn, c), 1)    # (tn, c)
        onehot = col == tgt_ref[...]                         # (tn, c) vs (tn, 1)
        shifted_gt = jnp.sum(jnp.where(onehot, shifted, 0.0),
                             axis=1, keepdims=True)          # (tn, 1)

        # logpt_gt = shifted_gt - lse ; logpt_pred = -lse
        # loss = -logpt_gt - beta * logpt_pred = (1 + beta) * lse - shifted_gt
        loss = one_plus_beta * lse - shifted_gt              # (tn, 1) f32

        if weighted:
            loss = loss * w_ref[...]

        # mask rows that are padding (N not a multiple of the row tile)
        row_ids = i * tn + lax.broadcasted_iota(jnp.int32, (tn, 1), 0)
        loss = jnp.where(row_ids < n_valid, loss, 0.0)

        if aggregate is None:
            out_ref[...] = loss
        else:
            @pl.when(i == 0)
            def _():
                out_ref[...] = jnp.zeros_like(out_ref)

            out_ref[...] += jnp.sum(loss, keepdims=True)     # (1, 1)

            if aggregate == "mean":
                @pl.when(i == pl.num_programs(0) - 1)
                def _():
                    out_ref[...] = out_ref[...] * inv_n

    return kernel


def smoothlabel_cross_entropy_loss(logits, target, weights=None, *,
                                   beta=1.0, aggregate="mean", weighted=0,
                                   block_rows=None):
    assert logits.ndim == 2
    assert aggregate in ("sum", "mean", None)
    n, c = logits.shape
    itemsize = jnp.dtype(logits.dtype).itemsize

    use_weights = weighted in (1, 2)
    target = target.reshape(n, 1).astype(jnp.int32)
    if use_weights:
        assert weights is not None
        weights = weights.reshape(n, 1).astype(jnp.float32)

    # Row tile: keep one logits buffer <= ~2 MiB (double-buffered pipelining fits
    # the default scoped VMEM on v5e / v6e / v7x), rows a multiple of 8.
    if block_rows is None:
        budget = 2 * 1024 * 1024
        tn = max(8, min(1024, (budget // (c * itemsize)) // 8 * 8))
    else:
        tn = block_rows
    tn = min(tn, ((n + 7) // 8) * 8)
    n_pad = pl.cdiv(n, tn) * tn
    grid = (n_pad // tn,)

    if n_pad != n:
        pad = n_pad - n
        logits = jnp.pad(logits, ((0, pad), (0, 0)))
        target = jnp.pad(target, ((0, pad), (0, 0)))
        if use_weights:
            weights = jnp.pad(weights, ((0, pad), (0, 0)))

    in_specs = [
        pl.BlockSpec((tn, c), lambda i: (i, 0)),   # logits   (N, C)
        pl.BlockSpec((tn, 1), lambda i: (i, 0)),   # targets  (N, 1) int32
    ]
    args = [logits, target]
    if use_weights:
        in_specs.append(pl.BlockSpec((tn, 1), lambda i: (i, 0)))
        args.append(weights)

    if aggregate is None:
        out_shape = jax.ShapeDtypeStruct((n_pad, 1), jnp.float32)
        out_spec = pl.BlockSpec((tn, 1), lambda i: (i, 0))
        dim_sem = ("parallel",)          # rows independent -> both v7x cores
        out_bytes = n_pad * 4
    else:
        out_shape = jax.ShapeDtypeStruct((1, 1), jnp.float32)
        out_spec = pl.BlockSpec((1, 1), lambda i: (0, 0))    # resident accumulator
        dim_sem = ("arbitrary",)         # reduction over the row axis
        out_bytes = 4

    kernel = _make_kernel(beta=beta, aggregate=aggregate, weighted=use_weights,
                          n_valid=n, tn=tn, c=c)

    cost = pl.CostEstimate(
        flops=5 * n * c,
        transcendentals=n * c + n,
        bytes_accessed=n * c * itemsize + n * 4
        + (n * 4 if use_weights else 0) + out_bytes,
    )

    out = pl.pallas_call(
        kernel,
        out_shape=out_shape,
        grid=grid,
        in_specs=in_specs,
        out_specs=out_spec,
        compiler_params=pltpu.CompilerParams(
            dimension_semantics=dim_sem,
            vmem_limit_bytes=32 * 1024 * 1024,
        ),
        cost_estimate=cost,
    )(*args)

    if aggregate is None:
        return out[:n, 0]
    return out[0, 0]


def _reference(logits, target, weights=None, *, beta=1.0, aggregate="mean", weighted=0):
    logits = logits.astype(jnp.float32)
    logpt = jax.nn.log_softmax(logits, axis=1)
    logpt_gt = jnp.take_along_axis(
        logpt, target.reshape(-1, 1).astype(jnp.int32), axis=1)[:, 0]
    logpt_pred = jnp.max(logpt, axis=1)
    loss = -logpt_gt - beta * logpt_pred
    if weighted in (1, 2):
        loss = loss * weights
    if aggregate == "sum":
        return jnp.sum(loss)
    if aggregate == "mean":
        return jnp.mean(loss)
    return loss


if __name__ == "__main__":
    key = jax.random.PRNGKey(0)
    k1, k2, k3, k4, k5 = jax.random.split(key, 5)

    # Default module config: beta=1.0, aggregate='mean', weighted=0.
    N, C = 8, 128
    logits = jax.random.normal(k1, (N, C), dtype=jnp.float32)
    target = jax.random.randint(k2, (N,), 0, C, dtype=jnp.int32)

    out = smoothlabel_cross_entropy_loss(logits, target, beta=1.0,
                                         aggregate="mean", weighted=0)
    out = jax.block_until_ready(out)
    ref = _reference(logits, target, beta=1.0, aggregate="mean", weighted=0)
    assert jnp.allclose(out, ref, rtol=1e-5, atol=1e-5), (out, ref)

    # Weighted + sum path.
    weights = jax.random.uniform(k3, (N,), dtype=jnp.float32)
    out_w = smoothlabel_cross_entropy_loss(logits, target, weights, beta=0.5,
                                           aggregate="sum", weighted=1)
    out_w = jax.block_until_ready(out_w)
    ref_w = _reference(logits, target, weights, beta=0.5,
                       aggregate="sum", weighted=1)
    assert jnp.allclose(out_w, ref_w, rtol=1e-5, atol=1e-5), (out_w, ref_w)

    # aggregate=None with N not a multiple of 8 (exercises the padding/mask path).
    N2 = 10
    logits2 = jax.random.normal(k4, (N2, C), dtype=jnp.float32)
    target2 = jax.random.randint(k5, (N2,), 0, C, dtype=jnp.int32)
    out_n = smoothlabel_cross_entropy_loss(logits2, target2, beta=1.0,
                                           aggregate=None, weighted=0)
    out_n = jax.block_until_ready(out_n)
    ref_n = _reference(logits2, target2, beta=1.0, aggregate=None, weighted=0)
    assert out_n.shape == (N2,)
    assert jnp.allclose(out_n, ref_n, rtol=1e-5, atol=1e-5), (out_n, ref_n)

    print("KERNEL_OK")
</pallas_src>

<mosaic_0001>
module attributes {stable_mosaic.version = 11 : i64} {
  func.func @kernel(%arg0: i32, %arg1: memref<8x128xf32, #tpu.memory_space<vmem>>, %arg2: memref<8x1xi32, #tpu.memory_space<vmem>>, %arg3: memref<1x1xf32, #tpu.memory_space<vmem>>) attributes {dimension_semantics = [#tpu.dimension_semantics<arbitrary>], iteration_bounds = array<i64: 1>, scalar_prefetch = 0 : i64, scratch_operands = 0 : i64, tpu.core_type = #tpu.core_type<tc>, window_params = [{transform_indices = @transform_0, window_bounds = array<i64: 8, 128>}, {transform_indices = @transform_1, window_bounds = array<i64: 8, 1>}, {pipeline_mode = #tpu.pipeline_mode<synchronous>, transform_indices = @transform_2, window_bounds = array<i64: 1, 1>}]} {
    %c0 = arith.constant 0 : index
    %c0_0 = arith.constant 0 : index
    %0 = vector.load %arg1[%c0, %c0_0] : memref<8x128xf32, #tpu.memory_space<vmem>>, vector<8x128xf32>
    %cst = arith.constant dense<0xFF800000> : vector<8xf32>
    %1 = vector.multi_reduction <maximumf>, %0, %cst [1] : vector<8x128xf32> to vector<8xf32>
    %2 = vector.shape_cast %1 : vector<8xf32> to vector<8x1xf32>
    %3 = vector.broadcast %2 : vector<8x1xf32> to vector<8x128xf32>
    %4 = arith.subf %0, %3 : vector<8x128xf32>
    %5 = math.exp %4 : vector<8x128xf32>
    %cst_1 = arith.constant dense<0.000000e+00> : vector<8xf32>
    %6 = vector.multi_reduction <add>, %5, %cst_1 [1] : vector<8x128xf32> to vector<8xf32>
    %7 = vector.shape_cast %6 : vector<8xf32> to vector<8x1xf32>
    %8 = math.log %7 : vector<8x1xf32>
    %9 = tpu.iota {dimensions = array<i32: 1>} : vector<8x128xi32>
    %c0_2 = arith.constant 0 : index
    %c0_3 = arith.constant 0 : index
    %10 = vector.load %arg2[%c0_2, %c0_3] : memref<8x1xi32, #tpu.memory_space<vmem>>, vector<8x1xi32>
    %11 = vector.broadcast %10 : vector<8x1xi32> to vector<8x128xi32>
    %12 = arith.cmpi eq, %9, %11 : vector<8x128xi32>
    %cst_4 = arith.constant 0.000000e+00 : f32
    %13 = vector.broadcast %cst_4 : f32 to vector<8x128xf32>
    %14 = arith.select %12, %4, %13 : vector<8x128xi1>, vector<8x128xf32>
    %cst_5 = arith.constant dense<0.000000e+00> : vector<8xf32>
    %15 = vector.multi_reduction <add>, %14, %cst_5 [1] : vector<8x128xf32> to vector<8xf32>
    %16 = vector.shape_cast %15 : vector<8xf32> to vector<8x1xf32>
    %cst_6 = arith.constant 2.000000e+00 : f32
    %17 = vector.broadcast %cst_6 : f32 to vector<8x1xf32>
    %18 = arith.mulf %17, %8 : vector<8x1xf32>
    %19 = arith.subf %18, %16 : vector<8x1xf32>
    %c8_i32 = arith.constant 8 : i32
    %20 = arith.muli %arg0, %c8_i32 : i32
    %21 = tpu.iota {dimensions = array<i32: 0>} : vector<8x1xi32>
    %22 = vector.broadcast %20 : i32 to vector<8x1xi32>
    %23 = arith.addi %22, %21 : vector<8x1xi32>
    %c8_i32_7 = arith.constant 8 : i32
    %24 = vector.broadcast %c8_i32_7 : i32 to vector<8x1xi32>
    %25 = arith.cmpi slt, %23, %24 : vector<8x1xi32>
    %cst_8 = arith.constant 0.000000e+00 : f32
    %26 = vector.broadcast %cst_8 : f32 to vector<8x1xf32>
    %27 = arith.select %25, %19, %26 : vector<8x1xi1>, vector<8x1xf32>
    %c0_i32 = arith.constant 0 : i32
    %28 = arith.cmpi eq, %arg0, %c0_i32 : i32
    %29 = arith.extui %28 : i1 to i32
    %c0_i32_9 = arith.constant 0 : i32
    %30 = arith.cmpi ne, %29, %c0_i32_9 : i32
    scf.if %30 {
      %cst_17 = arith.constant 0.000000e+00 : f32
      %42 = vector.broadcast %cst_17 : f32 to vector<1x1xf32>
      %c0_18 = arith.constant 0 : index
      %c0_19 = arith.constant 0 : index
      %43 = vector.load %arg3[%c0_18, %c0_19] : memref<1x1xf32, #tpu.memory_space<vmem>>, vector<1x1xf32>
      tpu.vector_store %arg3[%c0_18, %c0_19], %42 {strides = array<i32>} : memref<1x1xf32, #tpu.memory_space<vmem>>, vector<1x1xf32>,
    } else {
    }
    %c0_10 = arith.constant 0 : index
    %c0_11 = arith.constant 0 : index
    %31 = vector.load %arg3[%c0_10, %c0_11] : memref<1x1xf32, #tpu.memory_space<vmem>>, vector<1x1xf32>
    %32 = vector.shape_cast %27 : vector<8x1xf32> to vector<1x8x1xf32>
    %cst_12 = arith.constant dense<0.000000e+00> : vector<1xf32>
    %33 = vector.multi_reduction <add>, %32, %cst_12 [1, 2] : vector<1x8x1xf32> to vector<1xf32>
    %34 = vector.shape_cast %33 : vector<1xf32> to vector<1x1x1xf32>
    %35 = vector.extract %34[0, 0, 0] : f32 from vector<1x1x1xf32>
    %36 = vector.broadcast %35 : f32 to vector<1x1xf32>
    %37 = arith.addf %31, %36 : vector<1x1xf32>
    %c0_13 = arith.constant 0 : index
    %c0_14 = arith.constant 0 : index
    %38 = vector.load %arg3[%c0_13, %c0_14] : memref<1x1xf32, #tpu.memory_space<vmem>>, vector<1x1xf32>
    tpu.vector_store %arg3[%c0_13, %c0_14], %37 {strides = array<i32>} : memref<1x1xf32, #tpu.memory_space<vmem>>, vector<1x1xf32>,
    %c0_i32_15 = arith.constant 0 : i32
    %39 = arith.cmpi eq, %arg0, %c0_i32_15 : i32
    %40 = arith.extui %39 : i1 to i32
    %c0_i32_16 = arith.constant 0 : i32
    %41 = arith.cmpi ne, %40, %c0_i32_16 : i32
    scf.if %41 {
      %c0_17 = arith.constant 0 : index
      %c0_18 = arith.constant 0 : index
      %42 = vector.load %arg3[%c0_17, %c0_18] : memref<1x1xf32, #tpu.memory_space<vmem>>, vector<1x1xf32>
      %cst_19 = arith.constant 1.250000e-01 : f32
      %43 = vector.broadcast %cst_19 : f32 to vector<1x1xf32>
      %44 = arith.mulf %42, %43 : vector<1x1xf32>
      %c0_20 = arith.constant 0 : index
      %c0_21 = arith.constant 0 : index
      %45 = vector.load %arg3[%c0_20, %c0_21] : memref<1x1xf32, #tpu.memory_space<vmem>>, vector<1x1xf32>
      tpu.vector_store %arg3[%c0_20, %c0_21], %44 {strides = array<i32>} : memref<1x1xf32, #tpu.memory_space<vmem>>, vector<1x1xf32>,
    } else {
    }
    return
  }
  func.func @transform_0(%arg0: i32) -> (i32, i32) {
    %c0_i32 = arith.constant 0 : i32
    %c0_i32_0 = arith.constant 0 : i32
    return %arg0, %c0_i32 : i32, i32
  }
  func.func @transform_1(%arg0: i32) -> (i32, i32) {
    %c0_i32 = arith.constant 0 : i32
    %c0_i32_0 = arith.constant 0 : i32
    return %arg0, %c0_i32 : i32, i32
  }
  func.func @transform_2(%arg0: i32) -> (i32, i32) {
    %c0_i32 = arith.constant 0 : i32
    %c0_i32_0 = arith.constant 0 : i32
    %c0_i32_1 = arith.constant 0 : i32
    return %c0_i32, %c0_i32_0 : i32, i32
  }
}

</mosaic_0001>

<llo_original>
// kernel: tpu_custom_call.1
$region0: #{tpu_custom_call.1}
  #allocation0 [shape = 'u32[]', space=smem, size = 0x4, offset = 0x4, fixed_abs, tag = 'smem constant byte address 0x4 - core index']
  #allocation1 [shape = 'u32[144,128]{1,0:T(1,128)}', space=vmem, size = 0x12000, scoped, tag = 'internal scratch']
  %s0 = inlined_call_operand.vmem [shape: f32[8,128], index: 0, kind: input, shape index: {}]
  %s1 = inlined_call_operand.vmem [shape: s32[8,1], index: 1, kind: input, shape index: {}]
  %s2 = inlined_call_operand.hbm [shape: f32[1,1], index: 2, kind: output, shape index: {}]
  %s3 = sld [smem:[#allocation0]]
  $region26: #{tpu_custom_call.1} parent=0
    _
  %s5 = ssub.s32 1, %s3
  %s6 = scalar_select 0, %s5, %s3
  $region1: #{tpu_custom_call.1} parent=0
    #allocation2 [shape = 'u8[512]{0}', space=vmem, size = 0x400, scoped, tag = 'output window, operand 0, single buffered']
    #allocation3 [shape = 's32[1]{0}', space=sflag, size = 0x4, scoped, tag = 'scoped memory for tpu_custom_call.1']
    %7 = vsyncpa [#allocation3], 0
    // Predicated region
    $region2: #{tpu_custom_call.1} parent=1 // pred_check
      _
    $region3: #{tpu_custom_call.1} parent=1 // pred_check_branch
      %9 = sbr.rel (0) target = $region5
    $region4: #{tpu_custom_call.1} parent=1 // pred_region
      _
    $region5: #{tpu_custom_call.1} parent=1 // pred_fallthru
      _
    // Predicated region
    $region6: #{tpu_custom_call.1} parent=1 // pred_check
      _
    $region7: #{tpu_custom_call.1} parent=1 // pred_check_branch
      %11 = sbr.rel (0) target = $region9
    $region8: #{tpu_custom_call.1} parent=1 // pred_region
      _
    $region9: #{tpu_custom_call.1} parent=1 // pred_fallthru
      _
    %v12 = vld [vmem:[%s0] sm:$0xff]
    %13 = vmax.xlane.f32.xlu0 %v12
    %v14 = vpop.xlane.xlu0 %13
    %v15 = vsub.f32 %v12, %v14
    %v16 = vmul.f32 %v15, 1.442695
    %v17 = vpow.pop %v16
    %18 = vadd.xlane.f32.xlu0 %v17
    %v19 = vpop.xlane.xlu0 %18
    %v20 = vlog2.pop %v19
    %v21 = vmul.f32 %v20, 0.6931472
    %v22 = vlaneseq
    %v23 = vand.u32 %v22, 127
    %v24 = vld [vmem:[%s1] sm:$0xff]
    %25 = vset.pattern.permute.xlu0 0
    %26 = vperm.xlu0 %25, %v24
    %v27 = vpop.permute.xlu0 %26
    %vm28 = vcmp.eq.s32.totalorder %v23, %v27
    %v29 = vsel %vm28, %v15, 0.0
    %30 = vadd.xlane.f32.xlu0 %v29
    %v31 = vpop.xlane.xlu0 %30
    %v32 = vmul.f32 %v21, 2.0
    %v33 = vsub.f32 %v32, %v31
    %s34 = smul.u32 0, 8
    %v35 = vlaneseq
    %v36 = vshrl.u32 %v35, 7
    %v37 = vstv %s34
    %v38 = vadd.s32 %v37, %v36
    %vm39 = vcmp.lt.s32.totalorder %v38, 8
    %v40 = vsel %vm39, %v33, 0.0
    %p41 = scmp.eq.s32.totalorder 0, 0
    // Predicated region
    $region10: #{tpu_custom_call.1} parent=1 // pred_check
      %p42 = pneg %p41
    $region11: #{tpu_custom_call.1} parent=1 // pred_check_branch
      %44 = sbr.rel (%p42) target = $region13
    $region12: #{tpu_custom_call.1} parent=1 // pred_region
      %vm45 = vcmask 0
      %46 = vst.msk [vmem:[#allocation2] sm:$0x1] %vm45, 0.0
    $region13: #{tpu_custom_call.1} parent=1 // pred_fallthru
      _
    %v47 = vld [vmem:[#allocation2] sm:$0x1]
    %vm48 = vcmask 7168
    %v49 = vsel %vm48, %v40, 0.0
    %50 = vadd.xlane.f32.xlu0 %v49
    %v51 = vpop.xlane.xlu0 %50
    %v52 = vrot.slane %v51, 4
    %v53 = vadd.f32 %v51, %v52
    %v54 = vrot.slane %v53, 2
    %v55 = vadd.f32 %v53, %v54
    %v56 = vrot.slane %v55, 1
    %v57 = vadd.f32 %v55, %v56
    %s58 = vtos %v57
    %v59 = vstv %s58
    %v60 = vadd.f32 %v47, %v59
    %vm61 = vcmask 0
    %62 = vst.msk [vmem:[#allocation2] sm:$0x1] %vm61, %v60
    // Predicated region
    $region14: #{tpu_custom_call.1} parent=1 // pred_check
      %p63 = pneg %p41
    $region15: #{tpu_custom_call.1} parent=1 // pred_check_branch
      %65 = sbr.rel (%p63) target = $region17
    $region16: #{tpu_custom_call.1} parent=1 // pred_region
      %v66 = vld [vmem:[#allocation2] sm:$0x1]
      %v67 = vmul.f32 %v66, 0.125
      %68 = vst.msk [vmem:[#allocation2] sm:$0x1] %vm61, %v67
    $region17: #{tpu_custom_call.1} parent=1 // pred_fallthru
      _
    // Predicated region
    $region18: #{tpu_custom_call.1} parent=1 // pred_check
      _
    $region19: #{tpu_custom_call.1} parent=1 // pred_check_branch
      %70 = sbr.rel (0) target = $region21
    $region20: #{tpu_custom_call.1} parent=1 // pred_region
      %s72 = ssub.s32 16, 16
      %73 = vsyncadd [#allocation3], %s72
      %s75 = sshll.u32 [#allocation2], 4
      %s76 = int_to_ptr.vmem [resolvable:$true] %s75
      %78 = dma.vmem_to_hbm [thread:$0]  %s76, 16, %s2, [#allocation3]
    $region21: #{tpu_custom_call.1} parent=1 // pred_fallthru
      _
    // Predicated region
    $region22: #{tpu_custom_call.1} parent=1 // pred_check
      _
    $region23: #{tpu_custom_call.1} parent=1 // pred_check_branch
      %80 = sbr.rel (0) target = $region25
    $region24: #{tpu_custom_call.1} parent=1 // pred_region
      %81 = dma.done [#allocation3], 16
    $region25: #{tpu_custom_call.1} parent=1 // pred_fallthru
      _
    %82 = vsyncpa [#allocation3], 1

</llo_original>
